<compile_context>
chip_gen: v7x
topology: tpu7x:2x2x1
jax: 0.10.0
libtpu: 0.0.40
codegen_flags: <defaults>
</compile_context>

<pallas_src>
import functools

import jax
import jax.numpy as jnp
from jax.experimental import pallas as pl
from jax.experimental.pallas import tpu as pltpu

LANE = 128     # lane width: internal hidden dims padded to a multiple of this
SUBLANE = 8    # sublane width for f32 batch tiles


def _round_up(x, m):
    return ((x + m - 1) // m) * m


def _fused_mlp_kernel(*refs, n_layers: int):
    """Fused Linear -> ReLU -> ... -> Linear for one batch tile.

    refs[0]               : x tile (tile_b, D0)
    refs[1 + 2*i]         : W_i    (K_i, N_i)  pre-transposed, hidden dims padded
    refs[2 + 2*i]         : b_i    (1,  N_i)   f32
    refs[1 + 2*n_layers]  : out tile (tile_b, D_L)
    """
    x_ref = refs[0]
    o_ref = refs[1 + 2 * n_layers]

    h = x_ref[...].astype(jnp.float32)
    for i in range(n_layers):
        w = refs[1 + 2 * i][...]                       # compute dtype (bf16/f32)
        b = refs[2 + 2 * i][...].astype(jnp.float32)   # (1, N_i), broadcasts over rows
        # MXU matmul with f32 accumulation; feed operands in the weight dtype.
        h = jnp.dot(h.astype(w.dtype), w, preferred_element_type=jnp.float32) + b
        if i != n_layers - 1:
            h = jnp.maximum(h, 0.0)                    # f32 VPU math (v5e-safe)
    o_ref[...] = h.astype(o_ref.dtype)


def init_mlp_params(key, net_dims, dtype=jnp.float32):
    """Deterministic init mirroring nn.Linear shapes: W_i (out, in), b_i (out,)."""
    params = []
    for i in range(len(net_dims) - 1):
        fan_in, fan_out = net_dims[i], net_dims[i + 1]
        key, wk, bk = jax.random.split(key, 3)
        bound = 1.0 / jnp.sqrt(fan_in)  # PyTorch default uniform scheme
        w = jax.random.uniform(wk, (fan_out, fan_in), dtype, -bound, bound)
        b = jax.random.uniform(bk, (fan_out,), dtype, -bound, bound)
        params.append((w, b))
    return params


def prepare_padded_params(params, compute_dtype=jnp.bfloat16):
    """One-time prep: transpose to (K, N), cast W to compute dtype, pad hidden dims.

    First-layer K and last-layer N are kept at their real sizes (they face HBM);
    internal hidden widths are zero-padded to 128 lanes (they stay in VMEM/vregs).
    Biases are kept in f32 (tiny, and the add runs in f32 anyway).
    """
    n_layers = len(params)
    padded = []
    for i, (w, b) in enumerate(params):
        out_dim, in_dim = w.shape
        k_dim = in_dim if i == 0 else _round_up(in_dim, LANE)
        n_dim = out_dim if i == n_layers - 1 else _round_up(out_dim, LANE)
        wt = (jnp.zeros((k_dim, n_dim), compute_dtype)
              .at[:in_dim, :out_dim].set(w.T.astype(compute_dtype)))
        bp = (jnp.zeros((1, n_dim), jnp.float32)
              .at[0, :out_dim].set(b.astype(jnp.float32)))
        padded.append((wt, bp))
    return padded


# Conservative resident-VMEM target so a tile sized here also fits v7x (64 MiB
# physical) and stays well clear of the v5e 16 MiB scoped default (we raise the
# scoped limit explicitly below).
_VMEM_BUDGET = 48 * 1024 * 1024
_VMEM_CAP = 64 * 1024 * 1024


@jax.jit
def network_forward(x, padded_params):
    """Forward pass of `Network` via one fused Pallas kernel with a batch grid."""
    batch, in_dim = x.shape
    n_layers = len(padded_params)
    assert padded_params[0][0].shape[0] == in_dim
    out_dim = padded_params[-1][0].shape[1]

    # --- VMEM budget & batch-tile selection (all static) -------------------
    param_bytes = sum(w.size * w.dtype.itemsize + b.size * b.dtype.itemsize
                      for w, b in padded_params)
    max_width = max([in_dim] + [w.shape[1] for w, _ in padded_params])

    def vmem_need(tb):
        io = 2 * tb * in_dim * x.dtype.itemsize + 2 * tb * out_dim * x.dtype.itemsize
        act = 3 * tb * max_width * 4          # a few live f32 activation tiles
        return param_bytes + io + act

    tile_b = min(256, _round_up(batch, SUBLANE))
    while tile_b > SUBLANE and vmem_need(tile_b) > _VMEM_BUDGET:
        tile_b //= 2
    grid_b = pl.cdiv(batch, tile_b)
    vmem_limit = int(min(max(2 * vmem_need(tile_b), 32 * 1024 * 1024), _VMEM_CAP))

    # --- Specs --------------------------------------------------------------
    # x / out: tiled along batch; full extent on the feature axis (no padding).
    in_specs = [pl.BlockSpec((tile_b, in_dim), lambda i: (i, 0))]
    flat_params = []
    for w, b in padded_params:
        # Full-array blocks with a constant index_map -> DMA'd once, resident.
        in_specs.append(pl.BlockSpec(w.shape, lambda i: (0, 0)))
        in_specs.append(pl.BlockSpec(b.shape, lambda i: (0, 0)))
        flat_params.extend((w, b))
    out_spec = pl.BlockSpec((tile_b, out_dim), lambda i: (i, 0))

    flops = sum(2 * batch * w.shape[0] * w.shape[1] for w, _ in padded_params)
    bytes_accessed = (x.size * x.dtype.itemsize
                      + batch * out_dim * x.dtype.itemsize
                      + param_bytes)

    kernel = functools.partial(_fused_mlp_kernel, n_layers=n_layers)
    return pl.pallas_call(
        kernel,
        out_shape=jax.ShapeDtypeStruct((batch, out_dim), x.dtype),
        grid=(grid_b,),
        in_specs=in_specs,
        out_specs=out_spec,
        compiler_params=pltpu.CompilerParams(
            dimension_semantics=("parallel",),
            vmem_limit_bytes=vmem_limit,
        ),
        cost_estimate=pl.CostEstimate(
            flops=flops, transcendentals=0, bytes_accessed=bytes_accessed),
    )(x, *flat_params)


def network_forward_ref(x, params):
    """Pure f32 reference (PyTorch layout params)."""
    n_layers = len(params)
    for i, (w, b) in enumerate(params):
        x = x @ w.T + b
        if i != n_layers - 1:
            x = jnp.maximum(x, 0.0)
    return x


def network_forward_mixed_ref(x, params, compute_dtype):
    """Reference emulating the kernel's mixed precision (operands in compute
    dtype, f32 accumulation, f32 bias/ReLU)."""
    n_layers = len(params)
    h = x.astype(jnp.float32)
    for i, (w, b) in enumerate(params):
        h = jnp.dot(h.astype(compute_dtype), w.astype(compute_dtype).T,
                    preferred_element_type=jnp.float32) + b.astype(jnp.float32)
        if i != n_layers - 1:
            h = jnp.maximum(h, 0.0)
    return h


if __name__ == "__main__":
    key = jax.random.PRNGKey(0)

    # Small MLP consistent with the module's constructor (net_dims list of ints).
    net_dims = [32, 64, 48, 16]
    batch = 256  # exercises the batch grid (2 tiles of 128 rows)

    key, pkey, xkey = jax.random.split(key, 3)
    params = init_mlp_params(pkey, net_dims)
    x = jax.random.normal(xkey, (batch, net_dims[0]), jnp.float32)

    # ---- f32 compute path: must match the pure-f32 reference tightly ------
    padded_f32 = prepare_padded_params(params, compute_dtype=jnp.float32)
    out_f32 = jax.block_until_ready(network_forward(x, padded_f32))
    ref_f32 = network_forward_ref(x, params)
    assert out_f32.shape == (batch, net_dims[-1])
    assert jnp.allclose(out_f32, ref_f32, atol=1e-5, rtol=1e-5), "f32 path mismatch"

    # ---- bf16 compute path (MXU-native): matches a mixed-precision ref ----
    padded_bf16 = prepare_padded_params(params, compute_dtype=jnp.bfloat16)
    out_bf16 = jax.block_until_ready(network_forward(x, padded_bf16))
    ref_mixed = network_forward_mixed_ref(x, params, jnp.bfloat16)
    assert out_bf16.shape == (batch, net_dims[-1])
    assert jnp.allclose(out_bf16, ref_mixed, atol=1e-3, rtol=1e-3), "bf16 path mismatch"
    # Loose sanity check against the full-precision reference.
    assert jnp.allclose(out_bf16, ref_f32, atol=2.5e-1, rtol=1e-1), "bf16 vs f32 drift"

    print("KERNEL_OK")
</pallas_src>

<mosaic_0001>
module attributes {stable_mosaic.version = 11 : i64} {
  func.func @_fused_mlp_kernel(%arg0: i32, %arg1: memref<256x32xf32, #tpu.memory_space<vmem>>, %arg2: memref<32x128xf32, #tpu.memory_space<vmem>>, %arg3: memref<1x128xf32, #tpu.memory_space<vmem>>, %arg4: memref<128x128xf32, #tpu.memory_space<vmem>>, %arg5: memref<1x128xf32, #tpu.memory_space<vmem>>, %arg6: memref<128x16xf32, #tpu.memory_space<vmem>>, %arg7: memref<1x16xf32, #tpu.memory_space<vmem>>, %arg8: memref<256x16xf32, #tpu.memory_space<vmem>>) attributes {dimension_semantics = [#tpu.dimension_semantics<parallel>], iteration_bounds = array<i64: 1>, scalar_prefetch = 0 : i64, scratch_operands = 0 : i64, tpu.core_type = #tpu.core_type<tc>, window_params = [{transform_indices = @transform_0, window_bounds = array<i64: 256, 32>}, {pipeline_mode = #tpu.pipeline_mode<synchronous>, transform_indices = @transform_1, window_bounds = array<i64: 32, 128>}, {pipeline_mode = #tpu.pipeline_mode<synchronous>, transform_indices = @transform_2, window_bounds = array<i64: 1, 128>}, {pipeline_mode = #tpu.pipeline_mode<synchronous>, transform_indices = @transform_3, window_bounds = array<i64: 128, 128>}, {pipeline_mode = #tpu.pipeline_mode<synchronous>, transform_indices = @transform_4, window_bounds = array<i64: 1, 128>}, {pipeline_mode = #tpu.pipeline_mode<synchronous>, transform_indices = @transform_5, window_bounds = array<i64: 128, 16>}, {pipeline_mode = #tpu.pipeline_mode<synchronous>, transform_indices = @transform_6, window_bounds = array<i64: 1, 16>}, {transform_indices = @transform_7, window_bounds = array<i64: 256, 16>}]} {
    %c0 = arith.constant 0 : index
    %c0_0 = arith.constant 0 : index
    %0 = vector.load %arg1[%c0, %c0_0] : memref<256x32xf32, #tpu.memory_space<vmem>>, vector<256x32xf32>
    %c0_1 = arith.constant 0 : index
    %c0_2 = arith.constant 0 : index
    %1 = vector.load %arg2[%c0_1, %c0_2] : memref<32x128xf32, #tpu.memory_space<vmem>>, vector<32x128xf32>
    %c0_3 = arith.constant 0 : index
    %c0_4 = arith.constant 0 : index
    %2 = vector.load %arg3[%c0_3, %c0_4] : memref<1x128xf32, #tpu.memory_space<vmem>>, vector<1x128xf32>
    %cst = arith.constant dense<0.000000e+00> : vector<256x128xf32>
    %3 = tpu.matmul %0, %1, %cst {dimension_numbers = #tpu.dot_dimension_numbers<[1], [0], [0], [1], [0, 0, 1, 1], [], []>} : vector<256x32xf32>, vector<32x128xf32>, vector<256x128xf32> -> vector<256x128xf32>
    %4 = vector.broadcast %2 : vector<1x128xf32> to vector<256x128xf32>
    %5 = arith.addf %3, %4 : vector<256x128xf32>
    %cst_5 = arith.constant 0.000000e+00 : f32
    %6 = vector.broadcast %cst_5 : f32 to vector<256x128xf32>
    %7 = arith.maximumf %5, %6 : vector<256x128xf32>
    %c0_6 = arith.constant 0 : index
    %c0_7 = arith.constant 0 : index
    %8 = vector.load %arg4[%c0_6, %c0_7] : memref<128x128xf32, #tpu.memory_space<vmem>>, vector<128x128xf32>
    %c0_8 = arith.constant 0 : index
    %c0_9 = arith.constant 0 : index
    %9 = vector.load %arg5[%c0_8, %c0_9] : memref<1x128xf32, #tpu.memory_space<vmem>>, vector<1x128xf32>
    %cst_10 = arith.constant dense<0.000000e+00> : vector<256x128xf32>
    %10 = tpu.matmul %7, %8, %cst_10 {dimension_numbers = #tpu.dot_dimension_numbers<[1], [0], [0], [1], [0, 0, 1, 1], [], []>} : vector<256x128xf32>, vector<128x128xf32>, vector<256x128xf32> -> vector<256x128xf32>
    %11 = vector.broadcast %9 : vector<1x128xf32> to vector<256x128xf32>
    %12 = arith.addf %10, %11 : vector<256x128xf32>
    %cst_11 = arith.constant 0.000000e+00 : f32
    %13 = vector.broadcast %cst_11 : f32 to vector<256x128xf32>
    %14 = arith.maximumf %12, %13 : vector<256x128xf32>
    %c0_12 = arith.constant 0 : index
    %c0_13 = arith.constant 0 : index
    %15 = vector.load %arg6[%c0_12, %c0_13] : memref<128x16xf32, #tpu.memory_space<vmem>>, vector<128x16xf32>
    %c0_14 = arith.constant 0 : index
    %c0_15 = arith.constant 0 : index
    %16 = vector.load %arg7[%c0_14, %c0_15] : memref<1x16xf32, #tpu.memory_space<vmem>>, vector<1x16xf32>
    %cst_16 = arith.constant dense<0.000000e+00> : vector<256x16xf32>
    %17 = tpu.matmul %14, %15, %cst_16 {dimension_numbers = #tpu.dot_dimension_numbers<[1], [0], [0], [1], [0, 0, 1, 1], [], []>} : vector<256x128xf32>, vector<128x16xf32>, vector<256x16xf32> -> vector<256x16xf32>
    %18 = vector.broadcast %16 : vector<1x16xf32> to vector<256x16xf32>
    %19 = arith.addf %17, %18 : vector<256x16xf32>
    %c0_17 = arith.constant 0 : index
    %c0_18 = arith.constant 0 : index
    %20 = vector.load %arg8[%c0_17, %c0_18] : memref<256x16xf32, #tpu.memory_space<vmem>>, vector<256x16xf32>
    tpu.vector_store %arg8[%c0_17, %c0_18], %19 {strides = array<i32>} : memref<256x16xf32, #tpu.memory_space<vmem>>, vector<256x16xf32>,
    return
  }
  func.func @transform_0(%arg0: i32) -> (i32, i32) {
    %c0_i32 = arith.constant 0 : i32
    %c0_i32_0 = arith.constant 0 : i32
    return %arg0, %c0_i32 : i32, i32
  }
  func.func @transform_1(%arg0: i32) -> (i32, i32) {
    %c0_i32 = arith.constant 0 : i32
    %c0_i32_0 = arith.constant 0 : i32
    %c0_i32_1 = arith.constant 0 : i32
    return %c0_i32, %c0_i32_0 : i32, i32
  }
  func.func @transform_2(%arg0: i32) -> (i32, i32) {
    %c0_i32 = arith.constant 0 : i32
    %c0_i32_0 = arith.constant 0 : i32
    %c0_i32_1 = arith.constant 0 : i32
    return %c0_i32, %c0_i32_0 : i32, i32
  }
  func.func @transform_3(%arg0: i32) -> (i32, i32) {
    %c0_i32 = arith.constant 0 : i32
    %c0_i32_0 = arith.constant 0 : i32
    %c0_i32_1 = arith.constant 0 : i32
    return %c0_i32, %c0_i32_0 : i32, i32
  }
  func.func @transform_4(%arg0: i32) -> (i32, i32) {
    %c0_i32 = arith.constant 0 : i32
    %c0_i32_0 = arith.constant 0 : i32
    %c0_i32_1 = arith.constant 0 : i32
    return %c0_i32, %c0_i32_0 : i32, i32
  }
  func.func @transform_5(%arg0: i32) -> (i32, i32) {
    %c0_i32 = arith.constant 0 : i32
    %c0_i32_0 = arith.constant 0 : i32
    %c0_i32_1 = arith.constant 0 : i32
    return %c0_i32, %c0_i32_0 : i32, i32
  }
  func.func @transform_6(%arg0: i32) -> (i32, i32) {
    %c0_i32 = arith.constant 0 : i32
    %c0_i32_0 = arith.constant 0 : i32
    %c0_i32_1 = arith.constant 0 : i32
    return %c0_i32, %c0_i32_0 : i32, i32
  }
  func.func @transform_7(%arg0: i32) -> (i32, i32) {
    %c0_i32 = arith.constant 0 : i32
    %c0_i32_0 = arith.constant 0 : i32
    return %arg0, %c0_i32 : i32, i32
  }
}

</mosaic_0001>

<llo_original>
// kernel: network_forward.1
$region0: #{network_forward.1}
  #allocation0 [shape = 'u32[]', space=smem, size = 0x4, offset = 0x4, fixed_abs, tag = 'smem constant byte address 0x4 - core index']
  #allocation1 [shape = 'u32[144,128]{1,0:T(1,128)}', space=vmem, size = 0x12000, scoped, tag = 'internal scratch']
  %s0 = inlined_call_operand.vmem [shape: f32[256,32], index: 0, kind: input, shape index: {}]
  %s1 = inlined_call_operand.vmem [shape: f32[32,128], index: 1, kind: input, shape index: {}]
  %s2 = inlined_call_operand.vmem [shape: f32[1,128], index: 2, kind: input, shape index: {}]
  %s3 = inlined_call_operand.vmem [shape: f32[128,128], index: 3, kind: input, shape index: {}]
  %s4 = inlined_call_operand.vmem [shape: f32[1,128], index: 4, kind: input, shape index: {}]
  %s5 = inlined_call_operand.vmem [shape: f32[128,16], index: 5, kind: input, shape index: {}]
  %s6 = inlined_call_operand.vmem [shape: f32[1,16], index: 6, kind: input, shape index: {}]
  %s7 = inlined_call_operand.vmem [shape: f32[256,16], index: 7, kind: output, shape index: {}]
  %s8 = sld [smem:[#allocation0]]
  $region38: #{network_forward.1} parent=0
    _
  %s10 = ssub.s32 1, %s8
  %s11 = scalar_select 0, %s10, %s8
  // Predicated region
  $region2: #{network_forward.1} parent=0 // pred_check
    _
  $region3: #{network_forward.1} parent=0 // pred_check_branch
    %13 = sbr.rel (0) target = $region5
  $region4: #{network_forward.1} parent=0 // pred_region
    _
  $region5: #{network_forward.1} parent=0 // pred_fallthru
    _
  // Predicated region
  $region6: #{network_forward.1} parent=0 // pred_check
    _
  $region7: #{network_forward.1} parent=0 // pred_check_branch
    %15 = sbr.rel (0) target = $region9
  $region8: #{network_forward.1} parent=0 // pred_region
    _
  $region9: #{network_forward.1} parent=0 // pred_fallthru
    _
  // Predicated region
  $region10: #{network_forward.1} parent=0 // pred_check
    _
  $region11: #{network_forward.1} parent=0 // pred_check_branch
    %17 = sbr.rel (0) target = $region13
  $region12: #{network_forward.1} parent=0 // pred_region
    _
  $region13: #{network_forward.1} parent=0 // pred_fallthru
    _
  // Predicated region
  $region14: #{network_forward.1} parent=0 // pred_check
    _
  $region15: #{network_forward.1} parent=0 // pred_check_branch
    %19 = sbr.rel (0) target = $region17
  $region16: #{network_forward.1} parent=0 // pred_region
    _
  $region17: #{network_forward.1} parent=0 // pred_fallthru
    _
  // Predicated region
  $region18: #{network_forward.1} parent=0 // pred_check
    _
  $region19: #{network_forward.1} parent=0 // pred_check_branch
    %21 = sbr.rel (0) target = $region21
  $region20: #{network_forward.1} parent=0 // pred_region
    _
  $region21: #{network_forward.1} parent=0 // pred_fallthru
    _
  // Predicated region
  $region22: #{network_forward.1} parent=0 // pred_check
    _
  $region23: #{network_forward.1} parent=0 // pred_check_branch
    %23 = sbr.rel (0) target = $region25
  $region24: #{network_forward.1} parent=0 // pred_region
    _
  $region25: #{network_forward.1} parent=0 // pred_fallthru
    _
  // Predicated region
  $region26: #{network_forward.1} parent=0 // pred_check
    _
  $region27: #{network_forward.1} parent=0 // pred_check_branch
    %25 = sbr.rel (0) target = $region29
  $region28: #{network_forward.1} parent=0 // pred_region
    _
  $region29: #{network_forward.1} parent=0 // pred_fallthru
    _
  %v26 = vld [vmem:[%s0] sm:$0xff]
  %v27 = vld [vmem:[%s0 + $0x8] sm:$0xff]
  %v28 = vld [vmem:[%s0 + $0x10] sm:$0xff]
  %v29 = vld [vmem:[%s0 + $0x18] sm:$0xff]
  %v30 = vld [vmem:[%s0 + $0x20] sm:$0xff]
  %v31 = vld [vmem:[%s0 + $0x28] sm:$0xff]
  %v32 = vld [vmem:[%s0 + $0x30] sm:$0xff]
  %v33 = vld [vmem:[%s0 + $0x38] sm:$0xff]
  %v34 = vld [vmem:[%s0 + $0x40] sm:$0xff]
  %v35 = vld [vmem:[%s0 + $0x48] sm:$0xff]
  %v36 = vld [vmem:[%s0 + $0x50] sm:$0xff]
  %v37 = vld [vmem:[%s0 + $0x58] sm:$0xff]
  %v38 = vld [vmem:[%s0 + $0x60] sm:$0xff]
  %v39 = vld [vmem:[%s0 + $0x68] sm:$0xff]
  %v40 = vld [vmem:[%s0 + $0x70] sm:$0xff]
  %v41 = vld [vmem:[%s0 + $0x78] sm:$0xff]
  %v42 = vld [vmem:[%s0 + $0x80] sm:$0xff]
  %v43 = vld [vmem:[%s0 + $0x88] sm:$0xff]
  %v44 = vld [vmem:[%s0 + $0x90] sm:$0xff]
  %v45 = vld [vmem:[%s0 + $0x98] sm:$0xff]
  %v46 = vld [vmem:[%s0 + $0xa0] sm:$0xff]
  %v47 = vld [vmem:[%s0 + $0xa8] sm:$0xff]
  %v48 = vld [vmem:[%s0 + $0xb0] sm:$0xff]
  %v49 = vld [vmem:[%s0 + $0xb8] sm:$0xff]
  %v50 = vld [vmem:[%s0 + $0xc0] sm:$0xff]
  %v51 = vld [vmem:[%s0 + $0xc8] sm:$0xff]
  %v52 = vld [vmem:[%s0 + $0xd0] sm:$0xff]
  %v53 = vld [vmem:[%s0 + $0xd8] sm:$0xff]
  %v54 = vld [vmem:[%s0 + $0xe0] sm:$0xff]
  %v55 = vld [vmem:[%s0 + $0xe8] sm:$0xff]
  %v56 = vld [vmem:[%s0 + $0xf0] sm:$0xff]
  %v57 = vld [vmem:[%s0 + $0xf8] sm:$0xff]
  %v58 = vld [vmem:[%s1] sm:$0xff]
  %v59 = vld [vmem:[%s1 + $0x8] sm:$0xff]
  %v60 = vld [vmem:[%s1 + $0x10] sm:$0xff]
  %v61 = vld [vmem:[%s1 + $0x18] sm:$0xff]
  %v62 = vld [vmem:[%s2] sm:$0x1]
  %v64 = vlaneseq
  %v65 = vshrl.u32 %v64, 7
  %v66 = vsub.s32 0, %v65
  %v67 = vrot.slane %v62, %v66
  %vm69 = vcmask 261120
  %v71 = vsel %vm69, %v26, 0
  %v74 = vsel %vm69, %v27, 0
  %v77 = vsel %vm69, %v28, 0
  %v80 = vsel %vm69, %v29, 0
  %v83 = vsel %vm69, %v30, 0
  %v86 = vsel %vm69, %v31, 0
  %v89 = vsel %vm69, %v32, 0
  %v92 = vsel %vm69, %v33, 0
  %v95 = vsel %vm69, %v34, 0
  %v98 = vsel %vm69, %v35, 0
  %v101 = vsel %vm69, %v36, 0
  %v104 = vsel %vm69, %v37, 0
  %v107 = vsel %vm69, %v38, 0
  %v110 = vsel %vm69, %v39, 0
  %v113 = vsel %vm69, %v40, 0
  %v116 = vsel %vm69, %v41, 0
  %v119 = vsel %vm69, %v42, 0
  %v122 = vsel %vm69, %v43, 0
  %v125 = vsel %vm69, %v44, 0
  %v128 = vsel %vm69, %v45, 0
  %v131 = vsel %vm69, %v46, 0
  %v134 = vsel %vm69, %v47, 0
  %v137 = vsel %vm69, %v48, 0
  %v140 = vsel %vm69, %v49, 0
  %v143 = vsel %vm69, %v50, 0
  %v146 = vsel %vm69, %v51, 0
  %v149 = vsel %vm69, %v52, 0
  %v152 = vsel %vm69, %v53, 0
  %v155 = vsel %vm69, %v54, 0
  %v158 = vsel %vm69, %v55, 0
  %v161 = vsel %vm69, %v56, 0
  %v164 = vsel %vm69, %v57, 0
  %166 = vmatprep.subr.mxu0 0.0
  %167 = vmatpush1.msra.mxu0 %v58
  %168 = vmatprep.subr.mxu0 0.0
  %169 = vmatpush1.msra.mxu0 %v59
  %170 = vmatprep.subr.mxu0 0.0
  %171 = vmatpush1.msra.mxu0 %v60
  %172 = vmatprep.subr.mxu0 0.0
  %173 = vmatpush1.msra.mxu0 %v61
  %174 = vmatprep.subr.mxu0 0.0
  %175 = vmatpush1.msra.mxu0 0.0
  %176 = vmatprep.subr.mxu0 0.0
  %177 = vmatpush1.msra.mxu0 0.0
  %178 = vmatprep.subr.mxu0 0.0
  %179 = vmatpush1.msra.mxu0 0.0
  %180 = vmatprep.subr.mxu0 0.0
  %181 = vmatpush1.msra.mxu0 0.0
  %182 = vmatprep.subr.mxu0 0.0
  %183 = vmatpush1.msra.mxu0 0.0
  %184 = vmatprep.subr.mxu0 0.0
  %185 = vmatpush1.msra.mxu0 0.0
  %186 = vmatprep.subr.mxu0 0.0
  %187 = vmatpush1.msra.mxu0 0.0
  %188 = vmatprep.subr.mxu0 0.0
  %189 = vmatpush1.msra.mxu0 0.0
  %190 = vmatprep.subr.mxu0 0.0
  %191 = vmatpush1.msra.mxu0 0.0
  %192 = vmatprep.subr.mxu0 0.0
  %193 = vmatpush1.msra.mxu0 0.0
  %194 = vmatprep.subr.mxu0 0.0
  %195 = vmatpush1.msra.mxu0 0.0
  %196 = vmatprep.subr.mxu0 0.0
  %197 = vmatpush1.msra.mxu0 0.0
  %198 = vmatprep.subr.mxu0 0.0
  %199 = vmatpush1.msra.mxu0 0.0
  %200 = vmatprep.subr.mxu0 0.0
  %201 = vmatpush1.msra.mxu0 0.0
  %202 = vmatprep.subr.mxu0 0.0
  %203 = vmatpush1.msra.mxu0 0.0
  %204 = vmatprep.subr.mxu0 0.0
  %205 = vmatpush1.msra.mxu0 0.0
  %206 = vmatprep.subr.mxu0 0.0
  %207 = vmatpush1.msra.mxu0 0.0
  %208 = vmatprep.subr.mxu0 0.0
  %209 = vmatpush1.msra.mxu0 0.0
  %210 = vmatprep.subr.mxu0 0.0
  %211 = vmatpush1.msra.mxu0 0.0
  %212 = vmatprep.subr.mxu0 0.0
  %213 = vmatpush1.msra.mxu0 0.0
  %214 = vmatprep.subr.mxu0 0.0
  %215 = vmatpush1.msra.mxu0 0.0
  %216 = vmatprep.subr.mxu0 0.0
  %217 = vmatpush1.msra.mxu0 0.0
  %218 = vmatprep.subr.mxu0 0.0
  %219 = vmatpush1.msra.mxu0 0.0
  %220 = vmatprep.subr.mxu0 0.0
  %221 = vmatpush1.msra.mxu0 0.0
  %222 = vmatprep.subr.mxu0 0.0
  %223 = vmatpush1.msra.mxu0 0.0
  %224 = vmatprep.subr.mxu0 0.0
  %225 = vmatpush1.msra.mxu0 0.0
  %226 = vmatprep.subr.mxu0 0.0
  %227 = vmatpush1.msra.mxu0 0.0
  %228 = vmatprep.subr.mxu0 0.0
  %229 = vmatpush1.msra.mxu0 0.0
  %230 = vmatprep.mubr.f32.mxu0 0.0
  %231 = vmatmul.mubr.f32.gmra.mrb[0].mxu0 %v71
  %v232 = vpop.f32.mrb[0].mxu0
  %v233 = vadd.f32 %v67, %v232
  %v234 = vpop.f32.mrb[0].mxu0
  %235 = vmatprep.mubr.f32.mxu0 0.0
  %236 = vmatmul.mubr.f32.gmra.mrb[0].mxu0 %v74
  %v237 = vpop.f32.mrb[0].mxu0
  %v238 = vadd.f32 %v67, %v237
  %v239 = vpop.f32.mrb[0].mxu0
  %240 = vmatprep.mubr.f32.mxu0 0.0
  %241 = vmatmul.mubr.f32.gmra.mrb[0].mxu0 %v77
  %v242 = vpop.f32.mrb[0].mxu0
  %v243 = vadd.f32 %v67, %v242
  %v244 = vpop.f32.mrb[0].mxu0
  %245 = vmatprep.mubr.f32.mxu0 0.0
  %246 = vmatmul.mubr.f32.gmra.mrb[0].mxu0 %v80
  %v247 = vpop.f32.mrb[0].mxu0
  %v248 = vadd.f32 %v67, %v247
  %v249 = vpop.f32.mrb[0].mxu0
  %250 = vmatprep.mubr.f32.mxu0 0.0
  %251 = vmatmul.mubr.f32.gmra.mrb[0].mxu0 %v83
  %v252 = vpop.f32.mrb[0].mxu0
  %v253 = vadd.f32 %v67, %v252
  %v254 = vpop.f32.mrb[0].mxu0
  %255 = vmatprep.mubr.f32.mxu0 0.0
  %256 = vmatmul.mubr.f32.gmra.mrb[0].mxu0 %v86
  %v257 = vpop.f32.mrb[0].mxu0
  %v258 = vadd.f32 %v67, %v257
  %v259 = vpop.f32.mrb[0].mxu0
  %260 = vmatprep.mubr.f32.mxu0 0.0
  %261 = vmatmul.mubr.f32.gmra.mrb[0].mxu0 %v89
  %v262 = vpop.f32.mrb[0].mxu0
  %v263 = vadd.f32 %v67, %v262
  %v264 = vpop.f32.mrb[0].mxu0
  %265 = vmatprep.mubr.f32.mxu0 0.0
  %266 = vmatmul.mubr.f32.gmra.mrb[0].mxu0 %v92
  %v267 = vpop.f32.mrb[0].mxu0
  %v268 = vadd.f32 %v67, %v267
  %v269 = vpop.f32.mrb[0].mxu0
  %270 = vmatprep.mubr.f32.mxu0 0.0
  %271 = vmatmul.mubr.f32.gmra.mrb[0].mxu0 %v95
  %v272 = vpop.f32.mrb[0].mxu0
  %v273 = vadd.f32 %v67, %v272
  %v274 = vpop.f32.mrb[0].mxu0
  %275 = vmatprep.mubr.f32.mxu0 0.0
  %276 = vmatmul.mubr.f32.gmra.mrb[0].mxu0 %v98
  %v277 = vpop.f32.mrb[0].mxu0
  %v278 = vadd.f32 %v67, %v277
  %v279 = vpop.f32.mrb[0].mxu0
  %280 = vmatprep.mubr.f32.mxu0 0.0
  %281 = vmatmul.mubr.f32.gmra.mrb[0].mxu0 %v101
  %v282 = vpop.f32.mrb[0].mxu0
  %v283 = vadd.f32 %v67, %v282
  %v284 = vpop.f32.mrb[0].mxu0
  %285 = vmatprep.mubr.f32.mxu0 0.0
  %286 = vmatmul.mubr.f32.gmra.mrb[0].mxu0 %v104
  %v287 = vpop.f32.mrb[0].mxu0
  %v288 = vadd.f32 %v67, %v287
  %v289 = vpop.f32.mrb[0].mxu0
  %290 = vmatprep.mubr.f32.mxu0 0.0
  %291 = vmatmul.mubr.f32.gmra.mrb[0].mxu0 %v107
  %v292 = vpop.f32.mrb[0].mxu0
  %v293 = vadd.f32 %v67, %v292
  %v294 = vpop.f32.mrb[0].mxu0
  %295 = vmatprep.mubr.f32.mxu0 0.0
  %296 = vmatmul.mubr.f32.gmra.mrb[0].mxu0 %v110
  %v297 = vpop.f32.mrb[0].mxu0
  %v298 = vadd.f32 %v67, %v297
  %v299 = vpop.f32.mrb[0].mxu0
  %300 = vmatprep.mubr.f32.mxu0 0.0
  %301 = vmatmul.mubr.f32.gmra.mrb[0].mxu0 %v113
  %v302 = vpop.f32.mrb[0].mxu0
  %v303 = vadd.f32 %v67, %v302
  %v304 = vpop.f32.mrb[0].mxu0
  %305 = vmatprep.mubr.f32.mxu0 0.0
  %306 = vmatmul.mubr.f32.gmra.mrb[0].mxu0 %v116
  %v307 = vpop.f32.mrb[0].mxu0
  %v308 = vadd.f32 %v67, %v307
  %v309 = vpop.f32.mrb[0].mxu0
  %310 = vmatprep.mubr.f32.mxu0 0.0
  %311 = vmatmul.mubr.f32.gmra.mrb[0].mxu0 %v119
  %v312 = vpop.f32.mrb[0].mxu0
  %v313 = vadd.f32 %v67, %v312
  %v314 = vpop.f32.mrb[0].mxu0
  %315 = vmatprep.mubr.f32.mxu0 0.0
  %316 = vmatmul.mubr.f32.gmra.mrb[0].mxu0 %v122
  %v317 = vpop.f32.mrb[0].mxu0
  %v318 = vadd.f32 %v67, %v317
  %v319 = vpop.f32.mrb[0].mxu0
  %320 = vmatprep.mubr.f32.mxu0 0.0
  %321 = vmatmul.mubr.f32.gmra.mrb[0].mxu0 %v125
  %v322 = vpop.f32.mrb[0].mxu0
  %v323 = vadd.f32 %v67, %v322
  %v324 = vpop.f32.mrb[0].mxu0
  %325 = vmatprep.mubr.f32.mxu0 0.0
  %326 = vmatmul.mubr.f32.gmra.mrb[0].mxu0 %v128
  %v327 = vpop.f32.mrb[0].mxu0
  %v328 = vadd.f32 %v67, %v327
  %v329 = vpop.f32.mrb[0].mxu0
  %330 = vmatprep.mubr.f32.mxu0 0.0
  %331 = vmatmul.mubr.f32.gmra.mrb[0].mxu0 %v131
  %v332 = vpop.f32.mrb[0].mxu0
  %v333 = vadd.f32 %v67, %v332
  %v334 = vpop.f32.mrb[0].mxu0
  %335 = vmatprep.mubr.f32.mxu0 0.0
  %336 = vmatmul.mubr.f32.gmra.mrb[0].mxu0 %v134
  %v337 = vpop.f32.mrb[0].mxu0
  %v338 = vadd.f32 %v67, %v337
  %v339 = vpop.f32.mrb[0].mxu0
  %340 = vmatprep.mubr.f32.mxu0 0.0
  %341 = vmatmul.mubr.f32.gmra.mrb[0].mxu0 %v137
  %v342 = vpop.f32.mrb[0].mxu0
  %v343 = vadd.f32 %v67, %v342
  %v344 = vpop.f32.mrb[0].mxu0
  %345 = vmatprep.mubr.f32.mxu0 0.0
  %346 = vmatmul.mubr.f32.gmra.mrb[0].mxu0 %v140
  %v347 = vpop.f32.mrb[0].mxu0
  %v348 = vadd.f32 %v67, %v347
  %v349 = vpop.f32.mrb[0].mxu0
  %350 = vmatprep.mubr.f32.mxu0 0.0
  %351 = vmatmul.mubr.f32.gmra.mrb[0].mxu0 %v143
  %v352 = vpop.f32.mrb[0].mxu0
  %v353 = vadd.f32 %v67, %v352
  %v354 = vpop.f32.mrb[0].mxu0
  %355 = vmatprep.mubr.f32.mxu0 0.0
  %356 = vmatmul.mubr.f32.gmra.mrb[0].mxu0 %v146
  %v357 = vpop.f32.mrb[0].mxu0
  %v358 = vadd.f32 %v67, %v357
  %v359 = vpop.f32.mrb[0].mxu0
  %360 = vmatprep.mubr.f32.mxu0 0.0
  %361 = vmatmul.mubr.f32.gmra.mrb[0].mxu0 %v149
  %v362 = vpop.f32.mrb[0].mxu0
  %v363 = vadd.f32 %v67, %v362
  %v364 = vpop.f32.mrb[0].mxu0
  %365 = vmatprep.mubr.f32.mxu0 0.0
  %366 = vmatmul.mubr.f32.gmra.mrb[0].mxu0 %v152
  %v367 = vpop.f32.mrb[0].mxu0
  %v368 = vadd.f32 %v67, %v367
  %v369 = vpop.f32.mrb[0].mxu0
  %370 = vmatprep.mubr.f32.mxu0 0.0
  %371 = vmatmul.mubr.f32.gmra.mrb[0].mxu0 %v155
  %v372 = vpop.f32.mrb[0].mxu0
  %v373 = vadd.f32 %v67, %v372
  %v374 = vpop.f32.mrb[0].mxu0
  %375 = vmatprep.mubr.f32.mxu0 0.0
  %376 = vmatmul.mubr.f32.gmra.mrb[0].mxu0 %v158
  %v377 = vpop.f32.mrb[0].mxu0
  %v378 = vadd.f32 %v67, %v377
  %v379 = vpop.f32.mrb[0].mxu0
  %380 = vmatprep.mubr.f32.mxu0 0.0
  %381 = vmatmul.mubr.f32.gmra.mrb[0].mxu0 %v161
  %v382 = vpop.f32.mrb[0].mxu0
  %v383 = vadd.f32 %v67, %v382
  %v384 = vpop.f32.mrb[0].mxu0
  %385 = vmatprep.mubr.f32.mxu0 0.0
  %386 = vmatmul.mubr.f32.gmra.mrb[0].mxu0 %v164
  %v387 = vpop.f32.mrb[0].mxu0
  %v388 = vadd.f32 %v67, %v387
  %v389 = vpop.f32.mrb[0].mxu0
  %390 = vdwg.mxu0
  %v391 = vmax.f32 %v233, 0.0
  %v392 = vmax.f32 %v238, 0.0
  %v393 = vmax.f32 %v243, 0.0
  %v394 = vmax.f32 %v248, 0.0
  %v395 = vmax.f32 %v253, 0.0
  %v396 = vmax.f32 %v258, 0.0
  %v397 = vmax.f32 %v263, 0.0
  %v398 = vmax.f32 %v268, 0.0
  %v399 = vmax.f32 %v273, 0.0
  %v400 = vmax.f32 %v278, 0.0
  %v401 = vmax.f32 %v283, 0.0
  %v402 = vmax.f32 %v288, 0.0
  %v403 = vmax.f32 %v293, 0.0
  %v404 = vmax.f32 %v298, 0.0
  %v405 = vmax.f32 %v303, 0.0
  %v406 = vmax.f32 %v308, 0.0
  %v407 = vmax.f32 %v313, 0.0
  %v408 = vmax.f32 %v318, 0.0
  %v409 = vmax.f32 %v323, 0.0
  %v410 = vmax.f32 %v328, 0.0
  %v411 = vmax.f32 %v333, 0.0
  %v412 = vmax.f32 %v338, 0.0
  %v413 = vmax.f32 %v343, 0.0
  %v414 = vmax.f32 %v348, 0.0
  %v415 = vmax.f32 %v353, 0.0
  %v416 = vmax.f32 %v358, 0.0
  %v417 = vmax.f32 %v363, 0.0
  %v418 = vmax.f32 %v368, 0.0
  %v419 = vmax.f32 %v373, 0.0
  %v420 = vmax.f32 %v378, 0.0
  %v421 = vmax.f32 %v383, 0.0
  %v422 = vmax.f32 %v388, 0.0
  %v423 = vld [vmem:[%s3] sm:$0xff]
  %v424 = vld [vmem:[%s3 + $0x8] sm:$0xff]
  %v425 = vld [vmem:[%s3 + $0x10] sm:$0xff]
  %v426 = vld [vmem:[%s3 + $0x18] sm:$0xff]
  %v427 = vld [vmem:[%s3 + $0x20] sm:$0xff]
  %v428 = vld [vmem:[%s3 + $0x28] sm:$0xff]
  %v429 = vld [vmem:[%s3 + $0x30] sm:$0xff]
  %v430 = vld [vmem:[%s3 + $0x38] sm:$0xff]
  %v431 = vld [vmem:[%s3 + $0x40] sm:$0xff]
  %v432 = vld [vmem:[%s3 + $0x48] sm:$0xff]
  %v433 = vld [vmem:[%s3 + $0x50] sm:$0xff]
  %v434 = vld [vmem:[%s3 + $0x58] sm:$0xff]
  %v435 = vld [vmem:[%s3 + $0x60] sm:$0xff]
  %v436 = vld [vmem:[%s3 + $0x68] sm:$0xff]
  %v437 = vld [vmem:[%s3 + $0x70] sm:$0xff]
  %v438 = vld [vmem:[%s3 + $0x78] sm:$0xff]
  %v439 = vld [vmem:[%s4] sm:$0x1]
  %v441 = vlaneseq
  %v442 = vshrl.u32 %v441, 7
  %v443 = vsub.s32 0, %v442
  %v444 = vrot.slane %v439, %v443
  %446 = vmatprep.subr.mxu0 0.0
  %447 = vmatpush1.msra.mxu0 %v423
  %448 = vmatprep.subr.mxu0 0.0
  %449 = vmatpush1.msra.mxu0 %v424
  %450 = vmatprep.subr.mxu0 0.0
  %451 = vmatpush1.msra.mxu0 %v425
  %452 = vmatprep.subr.mxu0 0.0
  %453 = vmatpush1.msra.mxu0 %v426
  %454 = vmatprep.subr.mxu0 0.0
  %455 = vmatpush1.msra.mxu0 %v427
  %456 = vmatprep.subr.mxu0 0.0
  %457 = vmatpush1.msra.mxu0 %v428
  %458 = vmatprep.subr.mxu0 0.0
  %459 = vmatpush1.msra.mxu0 %v429
  %460 = vmatprep.subr.mxu0 0.0
  %461 = vmatpush1.msra.mxu0 %v430
  %462 = vmatprep.subr.mxu0 0.0
  %463 = vmatpush1.msra.mxu0 %v431
  %464 = vmatprep.subr.mxu0 0.0
  %465 = vmatpush1.msra.mxu0 %v432
  %466 = vmatprep.subr.mxu0 0.0
  %467 = vmatpush1.msra.mxu0 %v433
  %468 = vmatprep.subr.mxu0 0.0
  %469 = vmatpush1.msra.mxu0 %v434
  %470 = vmatprep.subr.mxu0 0.0
  %471 = vmatpush1.msra.mxu0 %v435
  %472 = vmatprep.subr.mxu0 0.0
  %473 = vmatpush1.msra.mxu0 %v436
  %474 = vmatprep.subr.mxu0 0.0
  %475 = vmatpush1.msra.mxu0 %v437
  %476 = vmatprep.subr.mxu0 0.0
  %477 = vmatpush1.msra.mxu0 %v438
  %478 = vmatprep.subr.mxu0 0.0
  %479 = vmatpush1.msra.mxu0 0.0
  %480 = vmatprep.subr.mxu0 0.0
  %481 = vmatpush1.msra.mxu0 0.0
  %482 = vmatprep.subr.mxu0 0.0
  %483 = vmatpush1.msra.mxu0 0.0
  %484 = vmatprep.subr.mxu0 0.0
  %485 = vmatpush1.msra.mxu0 0.0
  %486 = vmatprep.subr.mxu0 0.0
  %487 = vmatpush1.msra.mxu0 0.0
  %488 = vmatprep.subr.mxu0 0.0
  %489 = vmatpush1.msra.mxu0 0.0
  %490 = vmatprep.subr.mxu0 0.0
  %491 = vmatpush1.msra.mxu0 0.0
  %492 = vmatprep.subr.mxu0 0.0
  %493 = vmatpush1.msra.mxu0 0.0
  %494 = vmatprep.subr.mxu0 0.0
  %495 = vmatpush1.msra.mxu0 0.0
  %496 = vmatprep.subr.mxu0 0.0
  %497 = vmatpush1.msra.mxu0 0.0
  %498 = vmatprep.subr.mxu0 0.0
  %499 = vmatpush1.msra.mxu0 0.0
  %500 = vmatprep.subr.mxu0 0.0
  %501 = vmatpush1.msra.mxu0 0.0
  %502 = vmatprep.subr.mxu0 0.0
  %503 = vmatpush1.msra.mxu0 0.0
  %504 = vmatprep.subr.mxu0 0.0
  %505 = vmatpush1.msra.mxu0 0.0
  %506 = vmatprep.subr.mxu0 0.0
  %507 = vmatpush1.msra.mxu0 0.0
  %508 = vmatprep.subr.mxu0 0.0
  %509 = vmatpush1.msra.mxu0 0.0
  %510 = vmatprep.mubr.f32.mxu0 0.0
  %511 = vmatmul.mubr.f32.gmra.mrb[0].mxu0 %v391
  %v512 = vpop.f32.mrb[0].mxu0
  %v513 = vadd.f32 %v444, %v512
  %v514 = vpop.f32.mrb[0].mxu0
  %515 = vmatprep.mubr.f32.mxu0 0.0
  %516 = vmatmul.mubr.f32.gmra.mrb[0].mxu0 %v392
  %v517 = vpop.f32.mrb[0].mxu0
  %v518 = vadd.f32 %v444, %v517
  %v519 = vpop.f32.mrb[0].mxu0
  %520 = vmatprep.mubr.f32.mxu0 0.0
  %521 = vmatmul.mubr.f32.gmra.mrb[0].mxu0 %v393
  %v522 = vpop.f32.mrb[0].mxu0
  %v523 = vadd.f32 %v444, %v522
  %v524 = vpop.f32.mrb[0].mxu0
  %525 = vmatprep.mubr.f32.mxu0 0.0
  %526 = vmatmul.mubr.f32.gmra.mrb[0].mxu0 %v394
  %v527 = vpop.f32.mrb[0].mxu0
  %v528 = vadd.f32 %v444, %v527
  %v529 = vpop.f32.mrb[0].mxu0
  %530 = vmatprep.mubr.f32.mxu0 0.0
  %531 = vmatmul.mubr.f32.gmra.mrb[0].mxu0 %v395
  %v532 = vpop.f32.mrb[0].mxu0
  %v533 = vadd.f32 %v444, %v532
  %v534 = vpop.f32.mrb[0].mxu0
  %535 = vmatprep.mubr.f32.mxu0 0.0
  %536 = vmatmul.mubr.f32.gmra.mrb[0].mxu0 %v396
  %v537 = vpop.f32.mrb[0].mxu0
  %v538 = vadd.f32 %v444, %v537
  %v539 = vpop.f32.mrb[0].mxu0
  %540 = vmatprep.mubr.f32.mxu0 0.0
  %541 = vmatmul.mubr.f32.gmra.mrb[0].mxu0 %v397
  %v542 = vpop.f32.mrb[0].mxu0
  %v543 = vadd.f32 %v444, %v542
  %v544 = vpop.f32.mrb[0].mxu0
  %545 = vmatprep.mubr.f32.mxu0 0.0
  %546 = vmatmul.mubr.f32.gmra.mrb[0].mxu0 %v398
  %v547 = vpop.f32.mrb[0].mxu0
  %v548 = vadd.f32 %v444, %v547
  %v549 = vpop.f32.mrb[0].mxu0
  %550 = vmatprep.mubr.f32.mxu0 0.0
  %551 = vmatmul.mubr.f32.gmra.mrb[0].mxu0 %v399
  %v552 = vpop.f32.mrb[0].mxu0
  %v553 = vadd.f32 %v444, %v552
  %v554 = vpop.f32.mrb[0].mxu0
  %555 = vmatprep.mubr.f32.mxu0 0.0
  %556 = vmatmul.mubr.f32.gmra.mrb[0].mxu0 %v400
  %v557 = vpop.f32.mrb[0].mxu0
  %v558 = vadd.f32 %v444, %v557
  %v559 = vpop.f32.mrb[0].mxu0
  %560 = vmatprep.mubr.f32.mxu0 0.0
  %561 = vmatmul.mubr.f32.gmra.mrb[0].mxu0 %v401
  %v562 = vpop.f32.mrb[0].mxu0
  %v563 = vadd.f32 %v444, %v562
  %v564 = vpop.f32.mrb[0].mxu0
  %565 = vmatprep.mubr.f32.mxu0 0.0
  %566 = vmatmul.mubr.f32.gmra.mrb[0].mxu0 %v402
  %v567 = vpop.f32.mrb[0].mxu0
  %v568 = vadd.f32 %v444, %v567
  %v569 = vpop.f32.mrb[0].mxu0
  %570 = vmatprep.mubr.f32.mxu0 0.0
  %571 = vmatmul.mubr.f32.gmra.mrb[0].mxu0 %v403
  %v572 = vpop.f32.mrb[0].mxu0
  %v573 = vadd.f32 %v444, %v572
  %v574 = vpop.f32.mrb[0].mxu0
  %575 = vmatprep.mubr.f32.mxu0 0.0
  %576 = vmatmul.mubr.f32.gmra.mrb[0].mxu0 %v404
  %v577 = vpop.f32.mrb[0].mxu0
  %v578 = vadd.f32 %v444, %v577
  %v579 = vpop.f32.mrb[0].mxu0
  %580 = vmatprep.mubr.f32.mxu0 0.0
  %581 = vmatmul.mubr.f32.gmra.mrb[0].mxu0 %v405
  %v582 = vpop.f32.mrb[0].mxu0
  %v583 = vadd.f32 %v444, %v582
  %v584 = vpop.f32.mrb[0].mxu0
  %585 = vmatprep.mubr.f32.mxu0 0.0
  %586 = vmatmul.mubr.f32.gmra.mrb[0].mxu0 %v406
  %v587 = vpop.f32.mrb[0].mxu0
  %v588 = vadd.f32 %v444, %v587
  %v589 = vpop.f32.mrb[0].mxu0
  %590 = vmatprep.mubr.f32.mxu0 0.0
  %591 = vmatmul.mubr.f32.gmra.mrb[0].mxu0 %v407
  %v592 = vpop.f32.mrb[0].mxu0
  %v593 = vadd.f32 %v444, %v592
  %v594 = vpop.f32.mrb[0].mxu0
  %595 = vmatprep.mubr.f32.mxu0 0.0
  %596 = vmatmul.mubr.f32.gmra.mrb[0].mxu0 %v408
  %v597 = vpop.f32.mrb[0].mxu0
  %v598 = vadd.f32 %v444, %v597
  %v599 = vpop.f32.mrb[0].mxu0
  %600 = vmatprep.mubr.f32.mxu0 0.0
  %601 = vmatmul.mubr.f32.gmra.mrb[0].mxu0 %v409
  %v602 = vpop.f32.mrb[0].mxu0
  %v603 = vadd.f32 %v444, %v602
  %v604 = vpop.f32.mrb[0].mxu0
  %605 = vmatprep.mubr.f32.mxu0 0.0
  %606 = vmatmul.mubr.f32.gmra.mrb[0].mxu0 %v410
  %v607 = vpop.f32.mrb[0].mxu0
  %v608 = vadd.f32 %v444, %v607
  %v609 = vpop.f32.mrb[0].mxu0
  %610 = vmatprep.mubr.f32.mxu0 0.0
  %611 = vmatmul.mubr.f32.gmra.mrb[0].mxu0 %v411
  %v612 = vpop.f32.mrb[0].mxu0
  %v613 = vadd.f32 %v444, %v612
  %v614 = vpop.f32.mrb[0].mxu0
  %615 = vmatprep.mubr.f32.mxu0 0.0
  %616 = vmatmul.mubr.f32.gmra.mrb[0].mxu0 %v412
  %v617 = vpop.f32.mrb[0].mxu0
  %v618 = vadd.f32 %v444, %v617
  %v619 = vpop.f32.mrb[0].mxu0
  %620 = vmatprep.mubr.f32.mxu0 0.0
  %621 = vmatmul.mubr.f32.gmra.mrb[0].mxu0 %v413
  %v622 = vpop.f32.mrb[0].mxu0
  %v623 = vadd.f32 %v444, %v622
  %v624 = vpop.f32.mrb[0].mxu0
  %625 = vmatprep.mubr.f32.mxu0 0.0
  %626 = vmatmul.mubr.f32.gmra.mrb[0].mxu0 %v414
  %v627 = vpop.f32.mrb[0].mxu0
  %v628 = vadd.f32 %v444, %v627
  %v629 = vpop.f32.mrb[0].mxu0
  %630 = vmatprep.mubr.f32.mxu0 0.0
  %631 = vmatmul.mubr.f32.gmra.mrb[0].mxu0 %v415
  %v632 = vpop.f32.mrb[0].mxu0
  %v633 = vadd.f32 %v444, %v632
  %v634 = vpop.f32.mrb[0].mxu0
  %635 = vmatprep.mubr.f32.mxu0 0.0
  %636 = vmatmul.mubr.f32.gmra.mrb[0].mxu0 %v416
  %v637 = vpop.f32.mrb[0].mxu0
  %v638 = vadd.f32 %v444, %v637
  %v639 = vpop.f32.mrb[0].mxu0
  %640 = vmatprep.mubr.f32.mxu0 0.0
  %641 = vmatmul.mubr.f32.gmra.mrb[0].mxu0 %v417
  %v642 = vpop.f32.mrb[0].mxu0
  %v643 = vadd.f32 %v444, %v642
  %v644 = vpop.f32.mrb[0].mxu0
  %645 = vmatprep.mubr.f32.mxu0 0.0
  %646 = vmatmul.mubr.f32.gmra.mrb[0].mxu0 %v418
  %v647 = vpop.f32.mrb[0].mxu0
  %v648 = vadd.f32 %v444, %v647
  %v649 = vpop.f32.mrb[0].mxu0
  %650 = vmatprep.mubr.f32.mxu0 0.0
  %651 = vmatmul.mubr.f32.gmra.mrb[0].mxu0 %v419
  %v652 = vpop.f32.mrb[0].mxu0
  %v653 = vadd.f32 %v444, %v652
  %v654 = vpop.f32.mrb[0].mxu0
  %655 = vmatprep.mubr.f32.mxu0 0.0
  %656 = vmatmul.mubr.f32.gmra.mrb[0].mxu0 %v420
  %v657 = vpop.f32.mrb[0].mxu0
  %v658 = vadd.f32 %v444, %v657
  %v659 = vpop.f32.mrb[0].mxu0
  %660 = vmatprep.mubr.f32.mxu0 0.0
  %661 = vmatmul.mubr.f32.gmra.mrb[0].mxu0 %v421
  %v662 = vpop.f32.mrb[0].mxu0
  %v663 = vadd.f32 %v444, %v662
  %v664 = vpop.f32.mrb[0].mxu0
  %665 = vmatprep.mubr.f32.mxu0 0.0
  %666 = vmatmul.mubr.f32.gmra.mrb[0].mxu0 %v422
  %v667 = vpop.f32.mrb[0].mxu0
  %v668 = vadd.f32 %v444, %v667
  %v669 = vpop.f32.mrb[0].mxu0
  %670 = vdwg.mxu0
  %v671 = vmax.f32 %v513, 0.0
  %v672 = vmax.f32 %v518, 0.0
  %v673 = vmax.f32 %v523, 0.0
  %v674 = vmax.f32 %v528, 0.0
  %v675 = vmax.f32 %v533, 0.0
  %v676 = vmax.f32 %v538, 0.0
  %v677 = vmax.f32 %v543, 0.0
  %v678 = vmax.f32 %v548, 0.0
  %v679 = vmax.f32 %v553, 0.0
  %v680 = vmax.f32 %v558, 0.0
  %v681 = vmax.f32 %v563, 0.0
  %v682 = vmax.f32 %v568, 0.0
  %v683 = vmax.f32 %v573, 0.0
  %v684 = vmax.f32 %v578, 0.0
  %v685 = vmax.f32 %v583, 0.0
  %v686 = vmax.f32 %v588, 0.0
  %v687 = vmax.f32 %v593, 0.0
  %v688 = vmax.f32 %v598, 0.0
  %v689 = vmax.f32 %v603, 0.0
  %v690 = vmax.f32 %v608, 0.0
  %v691 = vmax.f32 %v613, 0.0
  %v692 = vmax.f32 %v618, 0.0
  %v693 = vmax.f32 %v623, 0.0
  %v694 = vmax.f32 %v628, 0.0
  %v695 = vmax.f32 %v633, 0.0
  %v696 = vmax.f32 %v638, 0.0
  %v697 = vmax.f32 %v643, 0.0
  %v698 = vmax.f32 %v648, 0.0
  %v699 = vmax.f32 %v653, 0.0
  %v700 = vmax.f32 %v658, 0.0
  %v701 = vmax.f32 %v663, 0.0
  %v702 = vmax.f32 %v668, 0.0
  %v703 = vld [vmem:[%s5] sm:$0xff]
  %v704 = vld [vmem:[%s5 + $0x8] sm:$0xff]
  %v705 = vld [vmem:[%s5 + $0x10] sm:$0xff]
  %v706 = vld [vmem:[%s5 + $0x18] sm:$0xff]
  %v707 = vld [vmem:[%s5 + $0x20] sm:$0xff]
  %v708 = vld [vmem:[%s5 + $0x28] sm:$0xff]
  %v709 = vld [vmem:[%s5 + $0x30] sm:$0xff]
  %v710 = vld [vmem:[%s5 + $0x38] sm:$0xff]
  %v711 = vld [vmem:[%s5 + $0x40] sm:$0xff]
  %v712 = vld [vmem:[%s5 + $0x48] sm:$0xff]
  %v713 = vld [vmem:[%s5 + $0x50] sm:$0xff]
  %v714 = vld [vmem:[%s5 + $0x58] sm:$0xff]
  %v715 = vld [vmem:[%s5 + $0x60] sm:$0xff]
  %v716 = vld [vmem:[%s5 + $0x68] sm:$0xff]
  %v717 = vld [vmem:[%s5 + $0x70] sm:$0xff]
  %v718 = vld [vmem:[%s5 + $0x78] sm:$0xff]
  %v719 = vld [vmem:[%s6] sm:$0x1]
  %v721 = vlaneseq
  %v722 = vshrl.u32 %v721, 7
  %v723 = vsub.s32 0, %v722
  %v724 = vrot.slane %v719, %v723
  %726 = vmatprep.subr.mxu0 0.0
  %727 = vmatpush1.msra.mxu0 %v703
  %728 = vmatprep.subr.mxu0 0.0
  %729 = vmatpush1.msra.mxu0 %v704
  %730 = vmatprep.subr.mxu0 0.0
  %731 = vmatpush1.msra.mxu0 %v705
  %732 = vmatprep.subr.mxu0 0.0
  %733 = vmatpush1.msra.mxu0 %v706
  %734 = vmatprep.subr.mxu0 0.0
  %735 = vmatpush1.msra.mxu0 %v707
  %736 = vmatprep.subr.mxu0 0.0
  %737 = vmatpush1.msra.mxu0 %v708
  %738 = vmatprep.subr.mxu0 0.0
  %739 = vmatpush1.msra.mxu0 %v709
  %740 = vmatprep.subr.mxu0 0.0
  %741 = vmatpush1.msra.mxu0 %v710
  %742 = vmatprep.subr.mxu0 0.0
  %743 = vmatpush1.msra.mxu0 %v711
  %744 = vmatprep.subr.mxu0 0.0
  %745 = vmatpush1.msra.mxu0 %v712
  %746 = vmatprep.subr.mxu0 0.0
  %747 = vmatpush1.msra.mxu0 %v713
  %748 = vmatprep.subr.mxu0 0.0
  %749 = vmatpush1.msra.mxu0 %v714
  %750 = vmatprep.subr.mxu0 0.0
  %751 = vmatpush1.msra.mxu0 %v715
  %752 = vmatprep.subr.mxu0 0.0
  %753 = vmatpush1.msra.mxu0 %v716
  %754 = vmatprep.subr.mxu0 0.0
  %755 = vmatpush1.msra.mxu0 %v717
  %756 = vmatprep.subr.mxu0 0.0
  %757 = vmatpush1.msra.mxu0 %v718
  %758 = vmatprep.subr.mxu0 0.0
  %759 = vmatpush1.msra.mxu0 0.0
  %760 = vmatprep.subr.mxu0 0.0
  %761 = vmatpush1.msra.mxu0 0.0
  %762 = vmatprep.subr.mxu0 0.0
  %763 = vmatpush1.msra.mxu0 0.0
  %764 = vmatprep.subr.mxu0 0.0
  %765 = vmatpush1.msra.mxu0 0.0
  %766 = vmatprep.subr.mxu0 0.0
  %767 = vmatpush1.msra.mxu0 0.0
  %768 = vmatprep.subr.mxu0 0.0
  %769 = vmatpush1.msra.mxu0 0.0
  %770 = vmatprep.subr.mxu0 0.0
  %771 = vmatpush1.msra.mxu0 0.0
  %772 = vmatprep.subr.mxu0 0.0
  %773 = vmatpush1.msra.mxu0 0.0
  %774 = vmatprep.subr.mxu0 0.0
  %775 = vmatpush1.msra.mxu0 0.0
  %776 = vmatprep.subr.mxu0 0.0
  %777 = vmatpush1.msra.mxu0 0.0
  %778 = vmatprep.subr.mxu0 0.0
  %779 = vmatpush1.msra.mxu0 0.0
  %780 = vmatprep.subr.mxu0 0.0
  %781 = vmatpush1.msra.mxu0 0.0
  %782 = vmatprep.subr.mxu0 0.0
  %783 = vmatpush1.msra.mxu0 0.0
  %784 = vmatprep.subr.mxu0 0.0
  %785 = vmatpush1.msra.mxu0 0.0
  %786 = vmatprep.subr.mxu0 0.0
  %787 = vmatpush1.msra.mxu0 0.0
  %788 = vmatprep.subr.mxu0 0.0
  %789 = vmatpush1.msra.mxu0 0.0
  %790 = vmatprep.mubr.f32.mxu0 0.0
  %791 = vmatmul.mubr.f32.gmra.mrb[0].mxu0 %v671
  %v792 = vpop.f32.mrb[0].mxu0
  %v793 = vadd.f32 %v724, %v792
  %v794 = vpop.f32.mrb[0].mxu0
  %795 = vmatprep.mubr.f32.mxu0 0.0
  %796 = vmatmul.mubr.f32.gmra.mrb[0].mxu0 %v672
  %v797 = vpop.f32.mrb[0].mxu0
  %v798 = vadd.f32 %v724, %v797
  %v799 = vpop.f32.mrb[0].mxu0
  %800 = vmatprep.mubr.f32.mxu0 0.0
  %801 = vmatmul.mubr.f32.gmra.mrb[0].mxu0 %v673
  %v802 = vpop.f32.mrb[0].mxu0
  %v803 = vadd.f32 %v724, %v802
  %v804 = vpop.f32.mrb[0].mxu0
  %805 = vmatprep.mubr.f32.mxu0 0.0
  %806 = vmatmul.mubr.f32.gmra.mrb[0].mxu0 %v674
  %v807 = vpop.f32.mrb[0].mxu0
  %v808 = vadd.f32 %v724, %v807
  %v809 = vpop.f32.mrb[0].mxu0
  %810 = vmatprep.mubr.f32.mxu0 0.0
  %811 = vmatmul.mubr.f32.gmra.mrb[0].mxu0 %v675
  %v812 = vpop.f32.mrb[0].mxu0
  %v813 = vadd.f32 %v724, %v812
  %v814 = vpop.f32.mrb[0].mxu0
  %815 = vmatprep.mubr.f32.mxu0 0.0
  %816 = vmatmul.mubr.f32.gmra.mrb[0].mxu0 %v676
  %v817 = vpop.f32.mrb[0].mxu0
  %v818 = vadd.f32 %v724, %v817
  %v819 = vpop.f32.mrb[0].mxu0
  %820 = vmatprep.mubr.f32.mxu0 0.0
  %821 = vmatmul.mubr.f32.gmra.mrb[0].mxu0 %v677
  %v822 = vpop.f32.mrb[0].mxu0
  %v823 = vadd.f32 %v724, %v822
  %v824 = vpop.f32.mrb[0].mxu0
  %825 = vmatprep.mubr.f32.mxu0 0.0
  %826 = vmatmul.mubr.f32.gmra.mrb[0].mxu0 %v678
  %v827 = vpop.f32.mrb[0].mxu0
  %v828 = vadd.f32 %v724, %v827
  %v829 = vpop.f32.mrb[0].mxu0
  %830 = vmatprep.mubr.f32.mxu0 0.0
  %831 = vmatmul.mubr.f32.gmra.mrb[0].mxu0 %v679
  %v832 = vpop.f32.mrb[0].mxu0
  %v833 = vadd.f32 %v724, %v832
  %v834 = vpop.f32.mrb[0].mxu0
  %835 = vmatprep.mubr.f32.mxu0 0.0
  %836 = vmatmul.mubr.f32.gmra.mrb[0].mxu0 %v680
  %v837 = vpop.f32.mrb[0].mxu0
  %v838 = vadd.f32 %v724, %v837
  %v839 = vpop.f32.mrb[0].mxu0
  %840 = vmatprep.mubr.f32.mxu0 0.0
  %841 = vmatmul.mubr.f32.gmra.mrb[0].mxu0 %v681
  %v842 = vpop.f32.mrb[0].mxu0
  %v843 = vadd.f32 %v724, %v842
  %v844 = vpop.f32.mrb[0].mxu0
  %845 = vmatprep.mubr.f32.mxu0 0.0
  %846 = vmatmul.mubr.f32.gmra.mrb[0].mxu0 %v682
  %v847 = vpop.f32.mrb[0].mxu0
  %v848 = vadd.f32 %v724, %v847
  %v849 = vpop.f32.mrb[0].mxu0
  %850 = vmatprep.mubr.f32.mxu0 0.0
  %851 = vmatmul.mubr.f32.gmra.mrb[0].mxu0 %v683
  %v852 = vpop.f32.mrb[0].mxu0
  %v853 = vadd.f32 %v724, %v852
  %v854 = vpop.f32.mrb[0].mxu0
  %855 = vmatprep.mubr.f32.mxu0 0.0
  %856 = vmatmul.mubr.f32.gmra.mrb[0].mxu0 %v684
  %v857 = vpop.f32.mrb[0].mxu0
  %v858 = vadd.f32 %v724, %v857
  %v859 = vpop.f32.mrb[0].mxu0
  %860 = vmatprep.mubr.f32.mxu0 0.0
  %861 = vmatmul.mubr.f32.gmra.mrb[0].mxu0 %v685
  %v862 = vpop.f32.mrb[0].mxu0
  %v863 = vadd.f32 %v724, %v862
  %v864 = vpop.f32.mrb[0].mxu0
  %865 = vmatprep.mubr.f32.mxu0 0.0
  %866 = vmatmul.mubr.f32.gmra.mrb[0].mxu0 %v686
  %v867 = vpop.f32.mrb[0].mxu0
  %v868 = vadd.f32 %v724, %v867
  %v869 = vpop.f32.mrb[0].mxu0
  %870 = vmatprep.mubr.f32.mxu0 0.0
  %871 = vmatmul.mubr.f32.gmra.mrb[0].mxu0 %v687
  %v872 = vpop.f32.mrb[0].mxu0
  %v873 = vadd.f32 %v724, %v872
  %v874 = vpop.f32.mrb[0].mxu0
  %875 = vmatprep.mubr.f32.mxu0 0.0
  %876 = vmatmul.mubr.f32.gmra.mrb[0].mxu0 %v688
  %v877 = vpop.f32.mrb[0].mxu0
  %v878 = vadd.f32 %v724, %v877
  %v879 = vpop.f32.mrb[0].mxu0
  %880 = vmatprep.mubr.f32.mxu0 0.0
  %881 = vmatmul.mubr.f32.gmra.mrb[0].mxu0 %v689
  %v882 = vpop.f32.mrb[0].mxu0
  %v883 = vadd.f32 %v724, %v882
  %v884 = vpop.f32.mrb[0].mxu0
  %885 = vmatprep.mubr.f32.mxu0 0.0
  %886 = vmatmul.mubr.f32.gmra.mrb[0].mxu0 %v690
  %v887 = vpop.f32.mrb[0].mxu0
  %v888 = vadd.f32 %v724, %v887
  %v889 = vpop.f32.mrb[0].mxu0
  %890 = vmatprep.mubr.f32.mxu0 0.0
  %891 = vmatmul.mubr.f32.gmra.mrb[0].mxu0 %v691
  %v892 = vpop.f32.mrb[0].mxu0
  %v893 = vadd.f32 %v724, %v892
  %v894 = vpop.f32.mrb[0].mxu0
  %895 = vmatprep.mubr.f32.mxu0 0.0
  %896 = vmatmul.mubr.f32.gmra.mrb[0].mxu0 %v692
  %v897 = vpop.f32.mrb[0].mxu0
  %v898 = vadd.f32 %v724, %v897
  %v899 = vpop.f32.mrb[0].mxu0
  %900 = vmatprep.mubr.f32.mxu0 0.0
  %901 = vmatmul.mubr.f32.gmra.mrb[0].mxu0 %v693
  %v902 = vpop.f32.mrb[0].mxu0
  %v903 = vadd.f32 %v724, %v902
  %v904 = vpop.f32.mrb[0].mxu0
  %905 = vmatprep.mubr.f32.mxu0 0.0
  %906 = vmatmul.mubr.f32.gmra.mrb[0].mxu0 %v694
  %v907 = vpop.f32.mrb[0].mxu0
  %v908 = vadd.f32 %v724, %v907
  %v909 = vpop.f32.mrb[0].mxu0
  %910 = vmatprep.mubr.f32.mxu0 0.0
  %911 = vmatmul.mubr.f32.gmra.mrb[0].mxu0 %v695
  %v912 = vpop.f32.mrb[0].mxu0
  %v913 = vadd.f32 %v724, %v912
  %v914 = vpop.f32.mrb[0].mxu0
  %915 = vmatprep.mubr.f32.mxu0 0.0
  %916 = vmatmul.mubr.f32.gmra.mrb[0].mxu0 %v696
  %v917 = vpop.f32.mrb[0].mxu0
  %v918 = vadd.f32 %v724, %v917
  %v919 = vpop.f32.mrb[0].mxu0
  %920 = vmatprep.mubr.f32.mxu0 0.0
  %921 = vmatmul.mubr.f32.gmra.mrb[0].mxu0 %v697
  %v922 = vpop.f32.mrb[0].mxu0
  %v923 = vadd.f32 %v724, %v922
  %v924 = vpop.f32.mrb[0].mxu0
  %925 = vmatprep.mubr.f32.mxu0 0.0
  %926 = vmatmul.mubr.f32.gmra.mrb[0].mxu0 %v698
  %v927 = vpop.f32.mrb[0].mxu0
  %v928 = vadd.f32 %v724, %v927
  %v929 = vpop.f32.mrb[0].mxu0
  %930 = vmatprep.mubr.f32.mxu0 0.0
  %931 = vmatmul.mubr.f32.gmra.mrb[0].mxu0 %v699
  %v932 = vpop.f32.mrb[0].mxu0
  %v933 = vadd.f32 %v724, %v932
  %v934 = vpop.f32.mrb[0].mxu0
  %935 = vmatprep.mubr.f32.mxu0 0.0
  %936 = vmatmul.mubr.f32.gmra.mrb[0].mxu0 %v700
  %v937 = vpop.f32.mrb[0].mxu0
  %v938 = vadd.f32 %v724, %v937
  %v939 = vpop.f32.mrb[0].mxu0
  %940 = vmatprep.mubr.f32.mxu0 0.0
  %941 = vmatmul.mubr.f32.gmra.mrb[0].mxu0 %v701
  %v942 = vpop.f32.mrb[0].mxu0
  %v943 = vadd.f32 %v724, %v942
  %v944 = vpop.f32.mrb[0].mxu0
  %945 = vmatprep.mubr.f32.mxu0 0.0
  %946 = vmatmul.mubr.f32.gmra.mrb[0].mxu0 %v702
  %v947 = vpop.f32.mrb[0].mxu0
  %v948 = vadd.f32 %v724, %v947
  %v949 = vpop.f32.mrb[0].mxu0
  %950 = vdwg.mxu0
  %vm951 = vcmask 130048
  %952 = vst.msk [vmem:[%s7] sm:$0xff] %vm951, %v793
  %953 = vst.msk [vmem:[%s7 + $0x8] sm:$0xff] %vm951, %v798
  %954 = vst.msk [vmem:[%s7 + $0x10] sm:$0xff] %vm951, %v803
  %955 = vst.msk [vmem:[%s7 + $0x18] sm:$0xff] %vm951, %v808
  %956 = vst.msk [vmem:[%s7 + $0x20] sm:$0xff] %vm951, %v813
  %957 = vst.msk [vmem:[%s7 + $0x28] sm:$0xff] %vm951, %v818
  %958 = vst.msk [vmem:[%s7 + $0x30] sm:$0xff] %vm951, %v823
  %959 = vst.msk [vmem:[%s7 + $0x38] sm:$0xff] %vm951, %v828
  %960 = vst.msk [vmem:[%s7 + $0x40] sm:$0xff] %vm951, %v833
  %961 = vst.msk [vmem:[%s7 + $0x48] sm:$0xff] %vm951, %v838
  %962 = vst.msk [vmem:[%s7 + $0x50] sm:$0xff] %vm951, %v843
  %963 = vst.msk [vmem:[%s7 + $0x58] sm:$0xff] %vm951, %v848
  %964 = vst.msk [vmem:[%s7 + $0x60] sm:$0xff] %vm951, %v853
  %965 = vst.msk [vmem:[%s7 + $0x68] sm:$0xff] %vm951, %v858
  %966 = vst.msk [vmem:[%s7 + $0x70] sm:$0xff] %vm951, %v863
  %967 = vst.msk [vmem:[%s7 + $0x78] sm:$0xff] %vm951, %v868
  %968 = vst.msk [vmem:[%s7 + $0x80] sm:$0xff] %vm951, %v873
  %969 = vst.msk [vmem:[%s7 + $0x88] sm:$0xff] %vm951, %v878
  %970 = vst.msk [vmem:[%s7 + $0x90] sm:$0xff] %vm951, %v883
  %971 = vst.msk [vmem:[%s7 + $0x98] sm:$0xff] %vm951, %v888
  %972 = vst.msk [vmem:[%s7 + $0xa0] sm:$0xff] %vm951, %v893
  %973 = vst.msk [vmem:[%s7 + $0xa8] sm:$0xff] %vm951, %v898
  %974 = vst.msk [vmem:[%s7 + $0xb0] sm:$0xff] %vm951, %v903
  %975 = vst.msk [vmem:[%s7 + $0xb8] sm:$0xff] %vm951, %v908
  %976 = vst.msk [vmem:[%s7 + $0xc0] sm:$0xff] %vm951, %v913
  %977 = vst.msk [vmem:[%s7 + $0xc8] sm:$0xff] %vm951, %v918
  %978 = vst.msk [vmem:[%s7 + $0xd0] sm:$0xff] %vm951, %v923
  %979 = vst.msk [vmem:[%s7 + $0xd8] sm:$0xff] %vm951, %v928
  %980 = vst.msk [vmem:[%s7 + $0xe0] sm:$0xff] %vm951, %v933
  %981 = vst.msk [vmem:[%s7 + $0xe8] sm:$0xff] %vm951, %v938
  %982 = vst.msk [vmem:[%s7 + $0xf0] sm:$0xff] %vm951, %v943
  %983 = vst.msk [vmem:[%s7 + $0xf8] sm:$0xff] %vm951, %v948
  // Predicated region
  $region30: #{network_forward.1} parent=0 // pred_check
    _
  $region31: #{network_forward.1} parent=0 // pred_check_branch
    %985 = sbr.rel (0) target = $region33
  $region32: #{network_forward.1} parent=0 // pred_region
    _
  $region33: #{network_forward.1} parent=0 // pred_fallthru
    _
  // Predicated region
  $region34: #{network_forward.1} parent=0 // pred_check
    _
  $region35: #{network_forward.1} parent=0 // pred_check_branch
    %987 = sbr.rel (0) target = $region37
  $region36: #{network_forward.1} parent=0 // pred_region
    _
  $region37: #{network_forward.1} parent=0 // pred_fallthru
    _

</llo_original>
